<compile_context>
chip_gen: v7x
topology: tpu7x:2x2x1
jax: 0.10.0
libtpu: 0.0.40
codegen_flags: <defaults>
</compile_context>

<pallas_src>
import jax
import jax.numpy as jnp
from jax.experimental import pallas as pl
from jax.experimental.pallas import tpu as pltpu

IN_DIM = 21        # env.str_len * 2 + 1 with str_len = 10
H1 = 128
H2 = 256
N_ACTIONS = 4      # len(ep.actions_list)
# TODO(synk): exact len(ep.actions_list) depends on ReverseEnv; 4 chosen deterministically.

IN_PAD = 128       # contraction dim of first matmul padded to a full 128 lane tile
OUT_PAD = 128      # lane-dense output (avoids 4-wide masked vst.msk stores)
NEG_BIG = -1e30    # bias for padded action columns -> exp(.) == 0 in softmax


def _round_up(x, m):
    return (x + m - 1) // m * m


def policy_kernel(x_ref, w1_ref, b1_ref, w2_ref, b2_ref, w3_ref, b3_ref, out_ref):
    # x / weights are bf16 (native MXU fast path on v6e/v7x); accumulate in f32.
    # Bias add, ReLU and softmax stay f32 (v5e has no bf16 VPU/EUP).
    h1 = jnp.dot(x_ref[...], w1_ref[...],
                 preferred_element_type=jnp.float32) + b1_ref[...]
    h1 = jnp.maximum(h1, 0.0)

    h2 = jnp.dot(h1.astype(jnp.bfloat16), w2_ref[...],
                 preferred_element_type=jnp.float32) + b2_ref[...]
    h2 = jnp.maximum(h2, 0.0)

    # Padded action columns (>= N_ACTIONS) have zero weights and a -1e30 bias,
    # so they contribute exp(.) == 0 below -> softmax over the real 4 actions only.
    logits = jnp.dot(h2.astype(jnp.bfloat16), w3_ref[...],
                     preferred_element_type=jnp.float32) + b3_ref[...]

    # numerically-stable softmax over the (padded) action axis
    m = jnp.max(logits, axis=1, keepdims=True)
    e = jnp.exp(logits - m)
    denom = jnp.sum(e, axis=1, keepdims=True)
    out_ref[...] = (e * pl.reciprocal(denom, approx=True)).astype(out_ref.dtype)


def policy_forward(x, kernel_params, *, max_tile=1024):
    """x: (B, IN_DIM) f32; returns (B, N_ACTIONS) f32 softmax probabilities."""
    w1, b1, w2, b2, w3, b3 = kernel_params
    B = x.shape[0]

    # Batch tile: multiple of 8 sublanes, capped at max_tile (sweepable 512-4096
    # for large rollout batches; tiny batches collapse to a single 8-row tile).
    tb = min(max_tile, _round_up(B, 8))
    b_pad = _round_up(B, tb)
    grid = (b_pad // tb,)

    # Pad x to (b_pad, IN_PAD) bf16; extra rows/cols are zero (match zero w1 rows).
    x_p = jnp.zeros((b_pad, IN_PAD), jnp.bfloat16)
    x_p = x_p.at[:B, :IN_DIM].set(x.astype(jnp.bfloat16))

    # Weights/biases: same block every grid step -> stay VMEM-resident.
    resident = lambda shape: pl.BlockSpec(shape, lambda i: (0, 0))

    out = pl.pallas_call(
        policy_kernel,
        out_shape=jax.ShapeDtypeStruct((b_pad, OUT_PAD), jnp.float32),
        grid=grid,
        in_specs=[
            pl.BlockSpec((tb, IN_PAD), lambda i: (i, 0)),     # x: tiled over batch
            resident((IN_PAD, H1)), resident((1, H1)),
            resident((H1, H2)),     resident((1, H2)),
            resident((H2, OUT_PAD)), resident((1, OUT_PAD)),
        ],
        out_specs=pl.BlockSpec((tb, OUT_PAD), lambda i: (i, 0)),
        compiler_params=pltpu.CompilerParams(
            dimension_semantics=("parallel",)),   # batch shards across v7x's 2 TCs
    )(x_p, w1, b1, w2, b2, w3, b3)

    return out[:B, :N_ACTIONS]


def init_params(key):
    # Deterministic init mimicking nn.Linear's U(-1/sqrt(fan_in), 1/sqrt(fan_in)).
    ks = jax.random.split(key, 6)

    def lin(kw, kb, fan_in, fan_out):
        bound = 1.0 / jnp.sqrt(fan_in)
        w = jax.random.uniform(kw, (fan_in, fan_out), jnp.float32, -bound, bound)
        b = jax.random.uniform(kb, (1, fan_out), jnp.float32, -bound, bound)
        return w, b

    w1, b1 = lin(ks[0], ks[1], IN_DIM, H1)
    w2, b2 = lin(ks[2], ks[3], H1, H2)
    w3, b3 = lin(ks[4], ks[5], H2, N_ACTIONS)

    # Kernel-ready (padded) parameters:
    #   * w1 rows 21..127 zero (matches zero-padded x columns)
    #   * w3 cols 4..127 zero, b3 cols 4..127 = -1e30 (free softmax masking)
    #   * weights cast to bf16 (MXU inputs); biases kept f32 (VPU adds)
    w1_p = jnp.zeros((IN_PAD, H1), jnp.float32).at[:IN_DIM, :].set(w1)
    w3_p = jnp.zeros((H2, OUT_PAD), jnp.float32).at[:, :N_ACTIONS].set(w3)
    b3_p = jnp.full((1, OUT_PAD), NEG_BIG, jnp.float32).at[:, :N_ACTIONS].set(b3)

    kernel_params = (w1_p.astype(jnp.bfloat16), b1,
                     w2.astype(jnp.bfloat16), b2,
                     w3_p.astype(jnp.bfloat16), b3_p)
    ref_params = (w1, b1, w2, b2, w3, b3)
    return kernel_params, ref_params


def policy_ref(x, ref_params):
    # Pure-JAX f32 reference of the PyTorch forward pass.
    w1, b1, w2, b2, w3, b3 = ref_params
    h1 = jnp.maximum(x @ w1 + b1, 0.0)
    h2 = jnp.maximum(h1 @ w2 + b2, 0.0)
    logits = h2 @ w3 + b3
    return jax.nn.softmax(logits, axis=1)


if __name__ == "__main__":
    key = jax.random.PRNGKey(0)
    k_params, k_x = jax.random.split(key)

    kernel_params, ref_params = init_params(k_params)
    B = 2
    x = jax.random.normal(k_x, (B, IN_DIM), jnp.float32)

    probs = policy_forward(x, kernel_params)
    probs = jax.block_until_ready(probs)

    assert probs.shape == (B, N_ACTIONS)

    # rows of a softmax sum to 1 (approx reciprocal -> loose tolerance)
    row_sums = jnp.sum(probs, axis=1)
    assert bool(jnp.all(jnp.abs(row_sums - 1.0) < 1e-2))

    # bf16 matmuls vs f32 reference -> generous tolerance
    expected = policy_ref(x, ref_params)
    assert bool(jnp.all(jnp.abs(probs - expected) < 5e-2))

    print("KERNEL_OK")
</pallas_src>

<mosaic_0001>
module attributes {stable_mosaic.version = 11 : i64} {
  func.func @policy_kernel(%arg0: i32, %arg1: memref<8x128xbf16, #tpu.memory_space<vmem>>, %arg2: memref<128x128xbf16, #tpu.memory_space<vmem>>, %arg3: memref<1x128xf32, #tpu.memory_space<vmem>>, %arg4: memref<128x256xbf16, #tpu.memory_space<vmem>>, %arg5: memref<1x256xf32, #tpu.memory_space<vmem>>, %arg6: memref<256x128xbf16, #tpu.memory_space<vmem>>, %arg7: memref<1x128xf32, #tpu.memory_space<vmem>>, %arg8: memref<8x128xf32, #tpu.memory_space<vmem>>) attributes {dimension_semantics = [#tpu.dimension_semantics<parallel>], iteration_bounds = array<i64: 1>, scalar_prefetch = 0 : i64, scratch_operands = 0 : i64, tpu.core_type = #tpu.core_type<tc>, window_params = [{transform_indices = @transform_0, window_bounds = array<i64: 8, 128>}, {pipeline_mode = #tpu.pipeline_mode<synchronous>, transform_indices = @transform_1, window_bounds = array<i64: 128, 128>}, {pipeline_mode = #tpu.pipeline_mode<synchronous>, transform_indices = @transform_2, window_bounds = array<i64: 1, 128>}, {pipeline_mode = #tpu.pipeline_mode<synchronous>, transform_indices = @transform_3, window_bounds = array<i64: 128, 256>}, {pipeline_mode = #tpu.pipeline_mode<synchronous>, transform_indices = @transform_4, window_bounds = array<i64: 1, 256>}, {pipeline_mode = #tpu.pipeline_mode<synchronous>, transform_indices = @transform_5, window_bounds = array<i64: 256, 128>}, {pipeline_mode = #tpu.pipeline_mode<synchronous>, transform_indices = @transform_6, window_bounds = array<i64: 1, 128>}, {transform_indices = @transform_7, window_bounds = array<i64: 8, 128>}]} {
    %c0 = arith.constant 0 : index
    %c0_0 = arith.constant 0 : index
    %0 = vector.load %arg1[%c0, %c0_0] : memref<8x128xbf16, #tpu.memory_space<vmem>>, vector<8x128xbf16>
    %c0_1 = arith.constant 0 : index
    %c0_2 = arith.constant 0 : index
    %1 = vector.load %arg2[%c0_1, %c0_2] : memref<128x128xbf16, #tpu.memory_space<vmem>>, vector<128x128xbf16>
    %cst = arith.constant dense<0.000000e+00> : vector<8x128xf32>
    %2 = tpu.matmul %0, %1, %cst {dimension_numbers = #tpu.dot_dimension_numbers<[1], [0], [0], [1], [0, 0, 1, 1], [], []>} : vector<8x128xbf16>, vector<128x128xbf16>, vector<8x128xf32> -> vector<8x128xf32>
    %c0_3 = arith.constant 0 : index
    %c0_4 = arith.constant 0 : index
    %3 = vector.load %arg3[%c0_3, %c0_4] : memref<1x128xf32, #tpu.memory_space<vmem>>, vector<1x128xf32>
    %4 = vector.broadcast %3 : vector<1x128xf32> to vector<8x128xf32>
    %5 = arith.addf %2, %4 : vector<8x128xf32>
    %cst_5 = arith.constant 0.000000e+00 : f32
    %6 = vector.broadcast %cst_5 : f32 to vector<8x128xf32>
    %7 = arith.maximumf %5, %6 : vector<8x128xf32>
    %8 = arith.truncf %7 : vector<8x128xf32> to vector<8x128xbf16>
    %c0_6 = arith.constant 0 : index
    %c0_7 = arith.constant 0 : index
    %9 = vector.load %arg4[%c0_6, %c0_7] : memref<128x256xbf16, #tpu.memory_space<vmem>>, vector<128x256xbf16>
    %cst_8 = arith.constant dense<0.000000e+00> : vector<8x256xf32>
    %10 = tpu.matmul %8, %9, %cst_8 {dimension_numbers = #tpu.dot_dimension_numbers<[1], [0], [0], [1], [0, 0, 1, 1], [], []>} : vector<8x128xbf16>, vector<128x256xbf16>, vector<8x256xf32> -> vector<8x256xf32>
    %c0_9 = arith.constant 0 : index
    %c0_10 = arith.constant 0 : index
    %11 = vector.load %arg5[%c0_9, %c0_10] : memref<1x256xf32, #tpu.memory_space<vmem>>, vector<1x256xf32>
    %12 = vector.broadcast %11 : vector<1x256xf32> to vector<8x256xf32>
    %13 = arith.addf %10, %12 : vector<8x256xf32>
    %cst_11 = arith.constant 0.000000e+00 : f32
    %14 = vector.broadcast %cst_11 : f32 to vector<8x256xf32>
    %15 = arith.maximumf %13, %14 : vector<8x256xf32>
    %16 = arith.truncf %15 : vector<8x256xf32> to vector<8x256xbf16>
    %c0_12 = arith.constant 0 : index
    %c0_13 = arith.constant 0 : index
    %17 = vector.load %arg6[%c0_12, %c0_13] : memref<256x128xbf16, #tpu.memory_space<vmem>>, vector<256x128xbf16>
    %cst_14 = arith.constant dense<0.000000e+00> : vector<8x128xf32>
    %18 = tpu.matmul %16, %17, %cst_14 {dimension_numbers = #tpu.dot_dimension_numbers<[1], [0], [0], [1], [0, 0, 1, 1], [], []>} : vector<8x256xbf16>, vector<256x128xbf16>, vector<8x128xf32> -> vector<8x128xf32>
    %c0_15 = arith.constant 0 : index
    %c0_16 = arith.constant 0 : index
    %19 = vector.load %arg7[%c0_15, %c0_16] : memref<1x128xf32, #tpu.memory_space<vmem>>, vector<1x128xf32>
    %20 = vector.broadcast %19 : vector<1x128xf32> to vector<8x128xf32>
    %21 = arith.addf %18, %20 : vector<8x128xf32>
    %cst_17 = arith.constant dense<0xFF800000> : vector<8xf32>
    %22 = vector.multi_reduction <maximumf>, %21, %cst_17 [1] : vector<8x128xf32> to vector<8xf32>
    %23 = vector.shape_cast %22 : vector<8xf32> to vector<8x1xf32>
    %24 = vector.broadcast %23 : vector<8x1xf32> to vector<8x128xf32>
    %25 = arith.subf %21, %24 : vector<8x128xf32>
    %26 = math.exp %25 : vector<8x128xf32>
    %cst_18 = arith.constant dense<0.000000e+00> : vector<8xf32>
    %27 = vector.multi_reduction <add>, %26, %cst_18 [1] : vector<8x128xf32> to vector<8xf32>
    %28 = vector.shape_cast %27 : vector<8xf32> to vector<8x1xf32>
    %29 = tpu.reciprocal %28 {approx = true} : vector<8x1xf32> -> vector<8x1xf32>
    %30 = vector.broadcast %29 : vector<8x1xf32> to vector<8x128xf32>
    %31 = arith.mulf %26, %30 : vector<8x128xf32>
    %c0_19 = arith.constant 0 : index
    %c0_20 = arith.constant 0 : index
    %32 = vector.load %arg8[%c0_19, %c0_20] : memref<8x128xf32, #tpu.memory_space<vmem>>, vector<8x128xf32>
    tpu.vector_store %arg8[%c0_19, %c0_20], %31 {strides = array<i32>} : memref<8x128xf32, #tpu.memory_space<vmem>>, vector<8x128xf32>,
    return
  }
  func.func @transform_0(%arg0: i32) -> (i32, i32) {
    %c0_i32 = arith.constant 0 : i32
    %c0_i32_0 = arith.constant 0 : i32
    return %arg0, %c0_i32 : i32, i32
  }
  func.func @transform_1(%arg0: i32) -> (i32, i32) {
    %c0_i32 = arith.constant 0 : i32
    %c0_i32_0 = arith.constant 0 : i32
    %c0_i32_1 = arith.constant 0 : i32
    return %c0_i32, %c0_i32_0 : i32, i32
  }
  func.func @transform_2(%arg0: i32) -> (i32, i32) {
    %c0_i32 = arith.constant 0 : i32
    %c0_i32_0 = arith.constant 0 : i32
    %c0_i32_1 = arith.constant 0 : i32
    return %c0_i32, %c0_i32_0 : i32, i32
  }
  func.func @transform_3(%arg0: i32) -> (i32, i32) {
    %c0_i32 = arith.constant 0 : i32
    %c0_i32_0 = arith.constant 0 : i32
    %c0_i32_1 = arith.constant 0 : i32
    return %c0_i32, %c0_i32_0 : i32, i32
  }
  func.func @transform_4(%arg0: i32) -> (i32, i32) {
    %c0_i32 = arith.constant 0 : i32
    %c0_i32_0 = arith.constant 0 : i32
    %c0_i32_1 = arith.constant 0 : i32
    return %c0_i32, %c0_i32_0 : i32, i32
  }
  func.func @transform_5(%arg0: i32) -> (i32, i32) {
    %c0_i32 = arith.constant 0 : i32
    %c0_i32_0 = arith.constant 0 : i32
    %c0_i32_1 = arith.constant 0 : i32
    return %c0_i32, %c0_i32_0 : i32, i32
  }
  func.func @transform_6(%arg0: i32) -> (i32, i32) {
    %c0_i32 = arith.constant 0 : i32
    %c0_i32_0 = arith.constant 0 : i32
    %c0_i32_1 = arith.constant 0 : i32
    return %c0_i32, %c0_i32_0 : i32, i32
  }
  func.func @transform_7(%arg0: i32) -> (i32, i32) {
    %c0_i32 = arith.constant 0 : i32
    %c0_i32_0 = arith.constant 0 : i32
    return %arg0, %c0_i32 : i32, i32
  }
}

</mosaic_0001>

<llo_original>
// kernel: tpu_custom_call.1
$region0: #{tpu_custom_call.1}
  #allocation0 [shape = 'u32[]', space=smem, size = 0x4, offset = 0x4, fixed_abs, tag = 'smem constant byte address 0x4 - core index']
  #allocation1 [shape = 'u32[144,128]{1,0:T(1,128)}', space=vmem, size = 0x12000, scoped, tag = 'internal scratch']
  %s0 = inlined_call_operand.hbm [shape: bf16[8,128], index: 0, kind: input, shape index: {}]
  %s1 = inlined_call_operand.hbm [shape: bf16[128,128], index: 1, kind: input, shape index: {}]
  %s2 = inlined_call_operand.vmem [shape: f32[1,128], index: 2, kind: input, shape index: {}]
  %s3 = inlined_call_operand.hbm [shape: bf16[128,256], index: 3, kind: input, shape index: {}]
  %s4 = inlined_call_operand.vmem [shape: f32[1,256], index: 4, kind: input, shape index: {}]
  %s5 = inlined_call_operand.hbm [shape: bf16[256,128], index: 5, kind: input, shape index: {}]
  %s6 = inlined_call_operand.vmem [shape: f32[1,128], index: 6, kind: input, shape index: {}]
  %s7 = inlined_call_operand.hbm [shape: f32[8,128], index: 7, kind: output, shape index: {}]
  %s8 = sld [smem:[#allocation0]]
  $region54: #{tpu_custom_call.1} parent=0
    _
  %s10 = ssub.s32 1, %s8
  %s11 = scalar_select 0, %s10, %s8
  $region1: #{tpu_custom_call.1} parent=0
    #allocation2 [shape = 'u8[2048]{0}', space=vmem, size = 0x800, scoped, tag = 'input window, operand 0, single buffered']
    #allocation3 [shape = 's32[1]{0}', space=sflag, size = 0x4, scoped, tag = 'scoped memory for tpu_custom_call.1']
    #allocation4 [shape = 's32[1]{0}', space=sflag, size = 0x4, scoped, tag = 'scoped memory for tpu_custom_call.1']
    #allocation5 [shape = 'u8[32768]{0}', space=vmem, size = 0x8000, scoped, tag = 'input window, operand 1, single buffered']
    #allocation6 [shape = 's32[1]{0}', space=sflag, size = 0x4, scoped, tag = 'scoped memory for tpu_custom_call.1']
    #allocation7 [shape = 'u8[65536]{0}', space=vmem, size = 0x10000, scoped, tag = 'input window, operand 3, single buffered']
    #allocation8 [shape = 'u8[65536]{0}', space=vmem, size = 0x10000, scoped, tag = 'input window, operand 5, single buffered']
    #allocation9 [shape = 's32[1]{0}', space=sflag, size = 0x4, scoped, tag = 'scoped memory for tpu_custom_call.1']
    #allocation10 [shape = 'u8[4096]{0}', space=vmem, size = 0x1000, scoped, tag = 'output window, operand 0, single buffered']
    %12 = vsyncpa [#allocation3], 0
    %13 = vsyncpa [#allocation6], 0
    %14 = vsyncpa [#allocation9], 0
    %15 = vsyncpa [#allocation4], 0
    // Predicated region
    $region2: #{tpu_custom_call.1} parent=1 // pred_check
      _
    $region3: #{tpu_custom_call.1} parent=1 // pred_check_branch
      %17 = sbr.rel (0) target = $region5
    $region4: #{tpu_custom_call.1} parent=1 // pred_region
      %s19 = ssub.s32 64, 64
      %20 = vsyncadd [#allocation3], %s19
      %s22 = sshll.u32 [#allocation2], 4
      %s23 = int_to_ptr.vmem [resolvable:$true] %s22
      %25 = dma.hbm_to_vmem [thread:$0]  %s0, 64, %s23, [#allocation3]
    $region5: #{tpu_custom_call.1} parent=1 // pred_fallthru
      _
    // Predicated region
    $region6: #{tpu_custom_call.1} parent=1 // pred_check
      _
    $region7: #{tpu_custom_call.1} parent=1 // pred_check_branch
      %27 = sbr.rel (0) target = $region9
    $region8: #{tpu_custom_call.1} parent=1 // pred_region
      %s29 = ssub.s32 1024, 1024
      %30 = vsyncadd [#allocation6], %s29
      %s31 = sshll.u32 [#allocation5], 4
      %s32 = int_to_ptr.vmem [resolvable:$true] %s31
      %37 = dma.hbm_to_vmem [thread:$0]  %s1, 1024, %s32, [#allocation6], 64, 64, 4
    $region9: #{tpu_custom_call.1} parent=1 // pred_fallthru
      _
    // Predicated region
    $region10: #{tpu_custom_call.1} parent=1 // pred_check
      _
    $region11: #{tpu_custom_call.1} parent=1 // pred_check_branch
      %39 = sbr.rel (0) target = $region13
    $region12: #{tpu_custom_call.1} parent=1 // pred_region
      _
    $region13: #{tpu_custom_call.1} parent=1 // pred_fallthru
      _
    // Predicated region
    $region14: #{tpu_custom_call.1} parent=1 // pred_check
      _
    $region15: #{tpu_custom_call.1} parent=1 // pred_check_branch
      %41 = sbr.rel (0) target = $region17
    $region16: #{tpu_custom_call.1} parent=1 // pred_region
      %s43 = ssub.s32 2048, 2048
      %44 = vsyncadd [#allocation6], %s43
      %s45 = sshll.u32 [#allocation7], 4
      %s46 = int_to_ptr.vmem [resolvable:$true] %s45
      %51 = dma.hbm_to_vmem [thread:$0]  %s3, 2048, %s46, [#allocation6], 128, 128, 8
    $region17: #{tpu_custom_call.1} parent=1 // pred_fallthru
      _
    // Predicated region
    $region18: #{tpu_custom_call.1} parent=1 // pred_check
      _
    $region19: #{tpu_custom_call.1} parent=1 // pred_check_branch
      %53 = sbr.rel (0) target = $region21
    $region20: #{tpu_custom_call.1} parent=1 // pred_region
      _
    $region21: #{tpu_custom_call.1} parent=1 // pred_fallthru
      _
    // Predicated region
    $region22: #{tpu_custom_call.1} parent=1 // pred_check
      _
    $region23: #{tpu_custom_call.1} parent=1 // pred_check_branch
      %55 = sbr.rel (0) target = $region25
    $region24: #{tpu_custom_call.1} parent=1 // pred_region
      %s57 = ssub.s32 2048, 2048
      %58 = vsyncadd [#allocation9], %s57
      %s59 = sshll.u32 [#allocation8], 4
      %s60 = int_to_ptr.vmem [resolvable:$true] %s59
      %65 = dma.hbm_to_vmem [thread:$0]  %s5, 2048, %s60, [#allocation9], 64, 64, 4
    $region25: #{tpu_custom_call.1} parent=1 // pred_fallthru
      _
    // Predicated region
    $region26: #{tpu_custom_call.1} parent=1 // pred_check
      _
    $region27: #{tpu_custom_call.1} parent=1 // pred_check_branch
      %67 = sbr.rel (0) target = $region29
    $region28: #{tpu_custom_call.1} parent=1 // pred_region
      _
    $region29: #{tpu_custom_call.1} parent=1 // pred_fallthru
      _
    // Predicated region
    $region30: #{tpu_custom_call.1} parent=1 // pred_check
      _
    $region31: #{tpu_custom_call.1} parent=1 // pred_check_branch
      %69 = sbr.rel (0) target = $region33
    $region32: #{tpu_custom_call.1} parent=1 // pred_region
      %70 = dma.done [#allocation3], 64
    $region33: #{tpu_custom_call.1} parent=1 // pred_fallthru
      _
    // Predicated region
    $region34: #{tpu_custom_call.1} parent=1 // pred_check
      _
    $region35: #{tpu_custom_call.1} parent=1 // pred_check_branch
      %72 = sbr.rel (0) target = $region37
    $region36: #{tpu_custom_call.1} parent=1 // pred_region
      %73 = dma.done [#allocation6], 1024
    $region37: #{tpu_custom_call.1} parent=1 // pred_fallthru
      _
    // Predicated region
    $region38: #{tpu_custom_call.1} parent=1 // pred_check
      _
    $region39: #{tpu_custom_call.1} parent=1 // pred_check_branch
      %75 = sbr.rel (0) target = $region41
    $region40: #{tpu_custom_call.1} parent=1 // pred_region
      %76 = dma.done [#allocation6], 2048
    $region41: #{tpu_custom_call.1} parent=1 // pred_fallthru
      _
    // Predicated region
    $region42: #{tpu_custom_call.1} parent=1 // pred_check
      _
    $region43: #{tpu_custom_call.1} parent=1 // pred_check_branch
      %78 = sbr.rel (0) target = $region45
    $region44: #{tpu_custom_call.1} parent=1 // pred_region
      %79 = dma.done [#allocation9], 2048
    $region45: #{tpu_custom_call.1} parent=1 // pred_fallthru
      _
    %v81 = vld [vmem:[#allocation2] sm:$0xf]
    %v82 = vld [vmem:[#allocation5] sm:$0xf]
    %v83 = vld [vmem:[#allocation5 + $0x4] sm:$0xf]
    %v84 = vld [vmem:[#allocation5 + $0x8] sm:$0xf]
    %v85 = vld [vmem:[#allocation5 + $0xc] sm:$0xf]
    %v86 = vld [vmem:[#allocation5 + $0x10] sm:$0xf]
    %v87 = vld [vmem:[#allocation5 + $0x14] sm:$0xf]
    %v88 = vld [vmem:[#allocation5 + $0x18] sm:$0xf]
    %v89 = vld [vmem:[#allocation5 + $0x1c] sm:$0xf]
    %v90 = vld [vmem:[#allocation5 + $0x20] sm:$0xf]
    %v91 = vld [vmem:[#allocation5 + $0x24] sm:$0xf]
    %v92 = vld [vmem:[#allocation5 + $0x28] sm:$0xf]
    %v93 = vld [vmem:[#allocation5 + $0x2c] sm:$0xf]
    %v94 = vld [vmem:[#allocation5 + $0x30] sm:$0xf]
    %v95 = vld [vmem:[#allocation5 + $0x34] sm:$0xf]
    %v96 = vld [vmem:[#allocation5 + $0x38] sm:$0xf]
    %v97 = vld [vmem:[#allocation5 + $0x3c] sm:$0xf]
    %v98 = vld [vmem:[%s2] sm:$0x1]
    %v100 = vlaneseq
    %v101 = vshrl.u32 %v100, 7
    %v102 = vsub.s32 0, %v101
    %v103 = vrot.slane %v98, %v102
    %v121 = vunpack.c.l.b16 %v82
    %v122 = vunpack.c.l.b16 %v83
    %v123 = vunpack.c.l.b16 %v84
    %v124 = vunpack.c.l.b16 %v85
    %v125 = vunpack.c.l.b16 %v86
    %v126 = vunpack.c.l.b16 %v87
    %v127 = vunpack.c.l.b16 %v88
    %v128 = vunpack.c.l.b16 %v89
    %v129 = vunpack.c.l.b16 %v90
    %v130 = vunpack.c.l.b16 %v91
    %v131 = vunpack.c.l.b16 %v92
    %v132 = vunpack.c.l.b16 %v93
    %v133 = vunpack.c.l.b16 %v94
    %v134 = vunpack.c.l.b16 %v95
    %v135 = vunpack.c.l.b16 %v96
    %v136 = vunpack.c.l.b16 %v97
    %v137 = vpack.c.b16 %v122, %v121
    %v138 = vpack.c.b16 %v124, %v123
    %v139 = vpack.c.b16 %v126, %v125
    %v140 = vpack.c.b16 %v128, %v127
    %v141 = vpack.c.b16 %v130, %v129
    %v142 = vpack.c.b16 %v132, %v131
    %v143 = vpack.c.b16 %v134, %v133
    %v144 = vpack.c.b16 %v136, %v135
    %153 = vmatprep.subr.bf16.mxu0 0
    %154 = vmatpush1.bf16.msra.mxu0 %v137
    %155 = vmatprep.subr.bf16.mxu0 0
    %156 = vmatpush1.bf16.msra.mxu0 %v138
    %157 = vmatprep.subr.bf16.mxu0 0
    %158 = vmatpush1.bf16.msra.mxu0 %v139
    %159 = vmatprep.subr.bf16.mxu0 0
    %160 = vmatpush1.bf16.msra.mxu0 %v140
    %161 = vmatprep.subr.bf16.mxu0 0
    %162 = vmatpush1.bf16.msra.mxu0 %v141
    %163 = vmatprep.subr.bf16.mxu0 0
    %164 = vmatpush1.bf16.msra.mxu0 %v142
    %165 = vmatprep.subr.bf16.mxu0 0
    %166 = vmatpush1.bf16.msra.mxu0 %v143
    %167 = vmatprep.subr.bf16.mxu0 0
    %168 = vmatpush1.bf16.msra.mxu0 %v144
    %169 = vmatprep.subr.bf16.mxu0 0
    %170 = vmatpush1.bf16.msra.mxu0 0
    %171 = vmatprep.subr.bf16.mxu0 0
    %172 = vmatpush1.bf16.msra.mxu0 0
    %173 = vmatprep.subr.bf16.mxu0 0
    %174 = vmatpush1.bf16.msra.mxu0 0
    %175 = vmatprep.subr.bf16.mxu0 0
    %176 = vmatpush1.bf16.msra.mxu0 0
    %177 = vmatprep.subr.bf16.mxu0 0
    %178 = vmatpush1.bf16.msra.mxu0 0
    %179 = vmatprep.subr.bf16.mxu0 0
    %180 = vmatpush1.bf16.msra.mxu0 0
    %181 = vmatprep.subr.bf16.mxu0 0
    %182 = vmatpush1.bf16.msra.mxu0 0
    %183 = vmatprep.subr.bf16.mxu0 0
    %184 = vmatpush1.bf16.msra.mxu0 0
    %185 = vmatprep.mubr.bf16.mxu0 0
    %186 = vmatmul.mubr.bf16.gmra.mrb[0].mxu0 %v81
    %v187 = vpop.f32.mrb[0].mxu0
    %v188 = vadd.f32 %v103, %v187
    %v189 = vpop.f32.mrb[0].mxu0
    %v190 = vpop.f32.mrb[0].mxu0
    %v191 = vpop.f32.mrb[0].mxu0
    %192 = vdwg.mxu0
    %v193 = vmax.f32 %v188, 0.0
    %v194 = vpack.c.bf16 %v193, %v193
    %v195 = vld [vmem:[#allocation7] sm:$0xff]
    %v196 = vld [vmem:[#allocation7 + $0x8] sm:$0xff]
    %v197 = vld [vmem:[#allocation7 + $0x10] sm:$0xff]
    %v198 = vld [vmem:[#allocation7 + $0x18] sm:$0xff]
    %v199 = vld [vmem:[#allocation7 + $0x20] sm:$0xff]
    %v200 = vld [vmem:[#allocation7 + $0x28] sm:$0xff]
    %v201 = vld [vmem:[#allocation7 + $0x30] sm:$0xff]
    %v202 = vld [vmem:[#allocation7 + $0x38] sm:$0xff]
    %v203 = vld [vmem:[#allocation7 + $0x40] sm:$0xff]
    %v204 = vld [vmem:[#allocation7 + $0x48] sm:$0xff]
    %v205 = vld [vmem:[#allocation7 + $0x50] sm:$0xff]
    %v206 = vld [vmem:[#allocation7 + $0x58] sm:$0xff]
    %v207 = vld [vmem:[#allocation7 + $0x60] sm:$0xff]
    %v208 = vld [vmem:[#allocation7 + $0x68] sm:$0xff]
    %v209 = vld [vmem:[#allocation7 + $0x70] sm:$0xff]
    %v210 = vld [vmem:[#allocation7 + $0x78] sm:$0xff]
    %v211 = vld [vmem:[%s4] sm:$0x3]
    %v213 = vlaneseq
    %v214 = vshrl.u32 %v213, 7
    %v215 = vsub.s32 0, %v214
    %v216 = vrot.slane %v211, %v215
    %v217 = vlaneseq
    %v218 = vshrl.u32 %v217, 7
    %v219 = vsub.s32 1, %v218
    %v220 = vrot.slane %v211, %v219
    %v239 = vunpack.c.l.b16 %v195
    %v240 = vunpack.c.h.b16 %v195
    %v241 = vunpack.c.l.b16 %v196
    %v242 = vunpack.c.h.b16 %v196
    %v243 = vunpack.c.l.b16 %v197
    %v244 = vunpack.c.h.b16 %v197
    %v245 = vunpack.c.l.b16 %v198
    %v246 = vunpack.c.h.b16 %v198
    %v247 = vunpack.c.l.b16 %v199
    %v248 = vunpack.c.h.b16 %v199
    %v249 = vunpack.c.l.b16 %v200
    %v250 = vunpack.c.h.b16 %v200
    %v251 = vunpack.c.l.b16 %v201
    %v252 = vunpack.c.h.b16 %v201
    %v253 = vunpack.c.l.b16 %v202
    %v254 = vunpack.c.h.b16 %v202
    %v255 = vunpack.c.l.b16 %v203
    %v256 = vunpack.c.h.b16 %v203
    %v257 = vunpack.c.l.b16 %v204
    %v258 = vunpack.c.h.b16 %v204
    %v259 = vunpack.c.l.b16 %v205
    %v260 = vunpack.c.h.b16 %v205
    %v261 = vunpack.c.l.b16 %v206
    %v262 = vunpack.c.h.b16 %v206
    %v263 = vunpack.c.l.b16 %v207
    %v264 = vunpack.c.h.b16 %v207
    %v265 = vunpack.c.l.b16 %v208
    %v266 = vunpack.c.h.b16 %v208
    %v267 = vunpack.c.l.b16 %v209
    %v268 = vunpack.c.h.b16 %v209
    %v269 = vunpack.c.l.b16 %v210
    %v270 = vunpack.c.h.b16 %v210
    %v271 = vpack.c.b16 %v241, %v239
    %v272 = vpack.c.b16 %v242, %v240
    %v273 = vpack.c.b16 %v245, %v243
    %v274 = vpack.c.b16 %v246, %v244
    %v275 = vpack.c.b16 %v249, %v247
    %v276 = vpack.c.b16 %v250, %v248
    %v277 = vpack.c.b16 %v253, %v251
    %v278 = vpack.c.b16 %v254, %v252
    %v279 = vpack.c.b16 %v257, %v255
    %v280 = vpack.c.b16 %v258, %v256
    %v281 = vpack.c.b16 %v261, %v259
    %v282 = vpack.c.b16 %v262, %v260
    %v283 = vpack.c.b16 %v265, %v263
    %v284 = vpack.c.b16 %v266, %v264
    %v285 = vpack.c.b16 %v269, %v267
    %v286 = vpack.c.b16 %v270, %v268
    %303 = vmatprep.subr.bf16.mxu0 %v272
    %304 = vmatpush1.bf16.msra.mxu0 %v271
    %305 = vmatprep.subr.bf16.mxu0 %v274
    %306 = vmatpush1.bf16.msra.mxu0 %v273
    %307 = vmatprep.subr.bf16.mxu0 %v276
    %308 = vmatpush1.bf16.msra.mxu0 %v275
    %309 = vmatprep.subr.bf16.mxu0 %v278
    %310 = vmatpush1.bf16.msra.mxu0 %v277
    %311 = vmatprep.subr.bf16.mxu0 %v280
    %312 = vmatpush1.bf16.msra.mxu0 %v279
    %313 = vmatprep.subr.bf16.mxu0 %v282
    %314 = vmatpush1.bf16.msra.mxu0 %v281
    %315 = vmatprep.subr.bf16.mxu0 %v284
    %316 = vmatpush1.bf16.msra.mxu0 %v283
    %317 = vmatprep.subr.bf16.mxu0 %v286
    %318 = vmatpush1.bf16.msra.mxu0 %v285
    %319 = vmatprep.subr.bf16.mxu0 0
    %320 = vmatpush1.bf16.msra.mxu0 0
    %321 = vmatprep.subr.bf16.mxu0 0
    %322 = vmatpush1.bf16.msra.mxu0 0
    %323 = vmatprep.subr.bf16.mxu0 0
    %324 = vmatpush1.bf16.msra.mxu0 0
    %325 = vmatprep.subr.bf16.mxu0 0
    %326 = vmatpush1.bf16.msra.mxu0 0
    %327 = vmatprep.subr.bf16.mxu0 0
    %328 = vmatpush1.bf16.msra.mxu0 0
    %329 = vmatprep.subr.bf16.mxu0 0
    %330 = vmatpush1.bf16.msra.mxu0 0
    %331 = vmatprep.subr.bf16.mxu0 0
    %332 = vmatpush1.bf16.msra.mxu0 0
    %333 = vmatprep.subr.bf16.mxu0 0
    %334 = vmatpush1.bf16.msra.mxu0 0
    %335 = vmatprep.mubr.bf16.mxu0 0
    %336 = vmatmul.mubr.bf16.gmra.mrb[0].mxu0 %v194
    %v337 = vpop.f32.mrb[0].mxu0
    %v338 = vadd.f32 %v216, %v337
    %v339 = vpop.f32.mrb[0].mxu0
    %v340 = vadd.f32 %v220, %v339
    %v341 = vpop.f32.mrb[0].mxu0
    %v342 = vpop.f32.mrb[0].mxu0
    %343 = vdwg.mxu0
    %v344 = vmax.f32 %v338, 0.0
    %v345 = vmax.f32 %v340, 0.0
    %v346 = vpack.c.bf16 %v344, %v344
    %v347 = vpack.c.bf16 %v345, %v345
    %v348 = vld [vmem:[#allocation8] sm:$0xf]
    %v349 = vld [vmem:[#allocation8 + $0x4] sm:$0xf]
    %v350 = vld [vmem:[#allocation8 + $0x8] sm:$0xf]
    %v351 = vld [vmem:[#allocation8 + $0xc] sm:$0xf]
    %v352 = vld [vmem:[#allocation8 + $0x10] sm:$0xf]
    %v353 = vld [vmem:[#allocation8 + $0x14] sm:$0xf]
    %v354 = vld [vmem:[#allocation8 + $0x18] sm:$0xf]
    %v355 = vld [vmem:[#allocation8 + $0x1c] sm:$0xf]
    %v356 = vld [vmem:[#allocation8 + $0x20] sm:$0xf]
    %v357 = vld [vmem:[#allocation8 + $0x24] sm:$0xf]
    %v358 = vld [vmem:[#allocation8 + $0x28] sm:$0xf]
    %v359 = vld [vmem:[#allocation8 + $0x2c] sm:$0xf]
    %v360 = vld [vmem:[#allocation8 + $0x30] sm:$0xf]
    %v361 = vld [vmem:[#allocation8 + $0x34] sm:$0xf]
    %v362 = vld [vmem:[#allocation8 + $0x38] sm:$0xf]
    %v363 = vld [vmem:[#allocation8 + $0x3c] sm:$0xf]
    %v364 = vld [vmem:[#allocation8 + $0x40] sm:$0xf]
    %v365 = vld [vmem:[#allocation8 + $0x44] sm:$0xf]
    %v366 = vld [vmem:[#allocation8 + $0x48] sm:$0xf]
    %v367 = vld [vmem:[#allocation8 + $0x4c] sm:$0xf]
    %v368 = vld [vmem:[#allocation8 + $0x50] sm:$0xf]
    %v369 = vld [vmem:[#allocation8 + $0x54] sm:$0xf]
    %v370 = vld [vmem:[#allocation8 + $0x58] sm:$0xf]
    %v371 = vld [vmem:[#allocation8 + $0x5c] sm:$0xf]
    %v372 = vld [vmem:[#allocation8 + $0x60] sm:$0xf]
    %v373 = vld [vmem:[#allocation8 + $0x64] sm:$0xf]
    %v374 = vld [vmem:[#allocation8 + $0x68] sm:$0xf]
    %v375 = vld [vmem:[#allocation8 + $0x6c] sm:$0xf]
    %v376 = vld [vmem:[#allocation8 + $0x70] sm:$0xf]
    %v377 = vld [vmem:[#allocation8 + $0x74] sm:$0xf]
    %v378 = vld [vmem:[#allocation8 + $0x78] sm:$0xf]
    %v379 = vld [vmem:[#allocation8 + $0x7c] sm:$0xf]
    %v380 = vld [vmem:[%s6] sm:$0x1]
    %v382 = vlaneseq
    %v383 = vshrl.u32 %v382, 7
    %v384 = vsub.s32 0, %v383
    %v385 = vrot.slane %v380, %v384
    %v419 = vunpack.c.l.b16 %v348
    %v420 = vunpack.c.l.b16 %v349
    %v421 = vunpack.c.l.b16 %v350
    %v422 = vunpack.c.l.b16 %v351
    %v423 = vunpack.c.l.b16 %v352
    %v424 = vunpack.c.l.b16 %v353
    %v425 = vunpack.c.l.b16 %v354
    %v426 = vunpack.c.l.b16 %v355
    %v427 = vunpack.c.l.b16 %v356
    %v428 = vunpack.c.l.b16 %v357
    %v429 = vunpack.c.l.b16 %v358
    %v430 = vunpack.c.l.b16 %v359
    %v431 = vunpack.c.l.b16 %v360
    %v432 = vunpack.c.l.b16 %v361
    %v433 = vunpack.c.l.b16 %v362
    %v434 = vunpack.c.l.b16 %v363
    %v435 = vunpack.c.l.b16 %v364
    %v436 = vunpack.c.l.b16 %v365
    %v437 = vunpack.c.l.b16 %v366
    %v438 = vunpack.c.l.b16 %v367
    %v439 = vunpack.c.l.b16 %v368
    %v440 = vunpack.c.l.b16 %v369
    %v441 = vunpack.c.l.b16 %v370
    %v442 = vunpack.c.l.b16 %v371
    %v443 = vunpack.c.l.b16 %v372
    %v444 = vunpack.c.l.b16 %v373
    %v445 = vunpack.c.l.b16 %v374
    %v446 = vunpack.c.l.b16 %v375
    %v447 = vunpack.c.l.b16 %v376
    %v448 = vunpack.c.l.b16 %v377
    %v449 = vunpack.c.l.b16 %v378
    %v450 = vunpack.c.l.b16 %v379
    %v451 = vpack.c.b16 %v420, %v419
    %v452 = vpack.c.b16 %v422, %v421
    %v453 = vpack.c.b16 %v424, %v423
    %v454 = vpack.c.b16 %v426, %v425
    %v455 = vpack.c.b16 %v428, %v427
    %v456 = vpack.c.b16 %v430, %v429
    %v457 = vpack.c.b16 %v432, %v431
    %v458 = vpack.c.b16 %v434, %v433
    %v459 = vpack.c.b16 %v436, %v435
    %v460 = vpack.c.b16 %v438, %v437
    %v461 = vpack.c.b16 %v440, %v439
    %v462 = vpack.c.b16 %v442, %v441
    %v463 = vpack.c.b16 %v444, %v443
    %v464 = vpack.c.b16 %v446, %v445
    %v465 = vpack.c.b16 %v448, %v447
    %v466 = vpack.c.b16 %v450, %v449
    %483 = vmatprep.subr.bf16.mxu0 0
    %484 = vmatpush1.bf16.msra.mxu0 %v451
    %485 = vmatprep.subr.bf16.mxu0 0
    %486 = vmatpush1.bf16.msra.mxu0 %v452
    %487 = vmatprep.subr.bf16.mxu0 0
    %488 = vmatpush1.bf16.msra.mxu0 %v453
    %489 = vmatprep.subr.bf16.mxu0 0
    %490 = vmatpush1.bf16.msra.mxu0 %v454
    %491 = vmatprep.subr.bf16.mxu0 0
    %492 = vmatpush1.bf16.msra.mxu0 %v455
    %493 = vmatprep.subr.bf16.mxu0 0
    %494 = vmatpush1.bf16.msra.mxu0 %v456
    %495 = vmatprep.subr.bf16.mxu0 0
    %496 = vmatpush1.bf16.msra.mxu0 %v457
    %497 = vmatprep.subr.bf16.mxu0 0
    %498 = vmatpush1.bf16.msra.mxu0 %v458
    %499 = vmatprep.subr.bf16.mxu0 0
    %500 = vmatpush1.bf16.msra.mxu0 %v459
    %501 = vmatprep.subr.bf16.mxu0 0
    %502 = vmatpush1.bf16.msra.mxu0 %v460
    %503 = vmatprep.subr.bf16.mxu0 0
    %504 = vmatpush1.bf16.msra.mxu0 %v461
    %505 = vmatprep.subr.bf16.mxu0 0
    %506 = vmatpush1.bf16.msra.mxu0 %v462
    %507 = vmatprep.subr.bf16.mxu0 0
    %508 = vmatpush1.bf16.msra.mxu0 %v463
    %509 = vmatprep.subr.bf16.mxu0 0
    %510 = vmatpush1.bf16.msra.mxu0 %v464
    %511 = vmatprep.subr.bf16.mxu0 0
    %512 = vmatpush1.bf16.msra.mxu0 %v465
    %513 = vmatprep.subr.bf16.mxu0 0
    %514 = vmatpush1.bf16.msra.mxu0 %v466
    %515 = vmatprep.mubr.bf16.mxu0 %v347
    %516 = vmatmul.mubr.bf16.gmra.mrb[0].mxu0 %v346
    %v517 = vpop.f32.mrb[0].mxu0
    %v518 = vadd.f32 %v385, %v517
    %v519 = vpop.f32.mrb[0].mxu0
    %v520 = vpop.f32.mrb[0].mxu0
    %v521 = vpop.f32.mrb[0].mxu0
    %522 = vdwg.mxu0
    %523 = vmax.xlane.f32.xlu0 %v518
    %v524 = vpop.xlane.xlu0 %523
    %v525 = vsub.f32 %v518, %v524
    %v526 = vmul.f32 %v525, 1.442695
    %v527 = vpow.pop %v526
    %528 = vadd.xlane.f32.xlu0 %v527
    %v529 = vpop.xlane.xlu0 %528
    %v530 = vrcp.pop %v529
    %v531 = vmul.f32 %v527, %v530
    %532 = vst [vmem:[#allocation10] sm:$0xff] %v531
    // Predicated region
    $region46: #{tpu_custom_call.1} parent=1 // pred_check
      _
    $region47: #{tpu_custom_call.1} parent=1 // pred_check_branch
      %534 = sbr.rel (0) target = $region49
    $region48: #{tpu_custom_call.1} parent=1 // pred_region
      %s536 = ssub.s32 128, 128
      %537 = vsyncadd [#allocation4], %s536
      %s539 = sshll.u32 [#allocation10], 4
      %s540 = int_to_ptr.vmem [resolvable:$true] %s539
      %542 = dma.vmem_to_hbm [thread:$0]  %s540, 128, %s7, [#allocation4]
    $region49: #{tpu_custom_call.1} parent=1 // pred_fallthru
      _
    // Predicated region
    $region50: #{tpu_custom_call.1} parent=1 // pred_check
      _
    $region51: #{tpu_custom_call.1} parent=1 // pred_check_branch
      %544 = sbr.rel (0) target = $region53
    $region52: #{tpu_custom_call.1} parent=1 // pred_region
      %545 = dma.done [#allocation4], 128
    $region53: #{tpu_custom_call.1} parent=1 // pred_fallthru
      _
    %546 = vsyncpa [#allocation3], 1
    %547 = vsyncpa [#allocation6], 1
    %548 = vsyncpa [#allocation9], 1
    %549 = vsyncpa [#allocation4], 1

</llo_original>
